<compile_context>
chip_gen: v6e
topology: v6e:2x2x1
jax: 0.10.0
libtpu: 0.0.40
codegen_flags: <defaults>
</compile_context>

<pallas_src>
import functools

import jax
import jax.numpy as jnp
from jax.experimental import pallas as pl
from jax.experimental.pallas import tpu as pltpu


# --------------------------------- kernel ------------------------------------

def ea_kernel(x_ref, w_ref, b_ref, o_ref, *, H, WC, KH):
    """Fused EA for a block of Bblk images flattened to an (M, WC) slab.

    x_ref: (M, WC) f32      M = Bblk * H, WC = W * C (lane-dense)
    w_ref: (WC, KH*WC) bf16 width-Toeplitz packed 3x3 conv weight
    b_ref: (1, WC) f32      bias tiled per output lane (tile(bias, W))
    o_ref: (M, WC)          output slab
    """
    x = x_ref[...]                                   # f32, kept for the gating multiply
    M = x.shape[0]
    xb = x.astype(jnp.bfloat16)

    # One MXU matmul: all KW width-taps and all channels are packed into the
    # contraction; the KH row-taps are packed along the output columns (each a
    # 128-aligned lane slice).
    # TODO(synk): for large tiles split along N into KH chunks of width WC and
    # accumulate immediately to reduce the live f32 footprint (v7x 64 MiB VMEM).
    t = jnp.dot(xb, w_ref[...], preferred_element_type=jnp.float32)   # (M, KH*WC)

    ph = KH // 2
    # Image-local row index of every slab row (hoisted out of the tap loop).
    # Used both for the 'same' zero-padding at the top/bottom of each image and
    # to stop rows leaking across image boundaries when Bblk > 1.
    local = jax.lax.broadcasted_iota(jnp.int32, (M, WC), 0) % H

    # Init from the center tap + bias: saves a zero-fill and a separate VPU add.
    acc = t[:, ph * WC:(ph + 1) * WC] + b_ref[...]
    for dy in range(KH):
        s = dy - ph                                   # out[r] += td[r + s] (in-image)
        if s == 0:
            continue
        td = t[:, dy * WC:(dy + 1) * WC]              # 128-aligned lane slice
        rolled = pltpu.roll(td, shift=(-s) % M, axis=0)   # rolled[r] = td[(r+s) % M], XLU
        valid = (local + s >= 0) & (local + s < H)        # rows that stay inside the image
        acc = acc + jnp.where(valid, rolled, 0.0)

    gate = jax.nn.sigmoid(acc)                        # EUP exp + reciprocal, f32
    o_ref[...] = (x * gate).astype(o_ref.dtype)


# ------------------------------ parameter packing -----------------------------

def pack_conv_weight(w_hwio, W, out_dtype=jnp.bfloat16):
    """Build the width-Toeplitz packed weight M of shape (W*C, KH*W*Co) with

        M[q*C + ci, dy*W*Co + w*Co + co] = w_hwio[dy, q - w + KW//2, ci, co]

    (zero when the tap index falls outside [0, KW)).  For an input row x of
    shape (W*C,), (x @ M)[dy*W*Co + w*Co + co] is the 'same'-padded 1-D conv
    along W for row-tap dy -- W-padding is folded into the zeros of M.
    """
    KH, KW, C, Co = w_hwio.shape
    pw = KW // 2
    q = jnp.arange(W)[:, None]            # input column
    wo = jnp.arange(W)[None, :]           # output column
    dx = q - wo + pw                      # (W, W)
    valid = (dx >= 0) & (dx < KW)
    dxc = jnp.clip(dx, 0, KW - 1)
    m = w_hwio[:, dxc]                    # (KH, W, W, C, Co) indexed [dy, q, w, ci, co]
    m = m * valid[None, :, :, None, None].astype(w_hwio.dtype)
    m = jnp.transpose(m, (1, 3, 0, 2, 4)).reshape(W * C, KH * W * Co)
    return m.astype(out_dtype)


def make_ea_params(weight_hwio, bias, W):
    """Pack parameters ONCE (they depend only on the module weights); cache and
    reuse across forward calls instead of re-packing per call."""
    w_packed = pack_conv_weight(weight_hwio, W)
    b_tiled = jnp.tile(bias.astype(jnp.float32), W).reshape(1, W * bias.shape[0])
    return w_packed, b_tiled


# --------------------------------- wrapper ------------------------------------

@functools.partial(jax.jit, static_argnames=("grid_steps",))
def ea_forward(x_nhwc, w_packed, b_tiled, *, grid_steps=None):
    """EA forward. x_nhwc: (B,H,W,C); w_packed/b_tiled from make_ea_params."""
    B, H, W, C = x_nhwc.shape
    WC = W * C
    KH = w_packed.shape[1] // WC
    if grid_steps is None:
        # >= 2 steps keeps both v7x TensorCores fed; on v5e/v6e (1 TC) pass
        # grid_steps=1 to fold the whole batch into a single step.
        grid_steps = min(B, 2)
    assert B % grid_steps == 0, "batch must be divisible by grid_steps"
    bblk = B // grid_steps
    M = bblk * H                                   # matmul M dimension per grid step

    x2d = x_nhwc.reshape(B * H, WC)                # free contiguous merge

    # Rough per-step VMEM budget: double-buffered x/out, packed weight (double
    # buffered by default), f32 matmul result + elementwise temporaries.
    est = (2 * 2 * M * WC * 4
           + 2 * WC * KH * WC * w_packed.dtype.itemsize
           + M * KH * WC * 4
           + 4 * M * WC * 4)
    vmem_limit = int(min(max(2 * est, 16 * 1024 * 1024), 64 * 1024 * 1024))

    kernel = functools.partial(ea_kernel, H=H, WC=WC, KH=KH)
    out2d = pl.pallas_call(
        kernel,
        out_shape=jax.ShapeDtypeStruct((B * H, WC), x_nhwc.dtype),
        grid=(grid_steps,),
        in_specs=[
            pl.BlockSpec((M, WC), lambda b: (b, 0)),
            pl.BlockSpec((WC, KH * WC), lambda b: (0, 0)),   # constant index -> DMA'd once
            pl.BlockSpec((1, WC), lambda b: (0, 0)),
        ],
        out_specs=pl.BlockSpec((M, WC), lambda b: (b, 0)),
        compiler_params=pltpu.CompilerParams(
            dimension_semantics=("parallel",),
            vmem_limit_bytes=vmem_limit,
        ),
    )(x2d, w_packed, b_tiled)
    return out2d.reshape(B, H, W, C)


# ----------------------------------- demo --------------------------------------

if __name__ == "__main__":
    B, dim, H, W = 4, 16, 16, 16

    key = jax.random.PRNGKey(0)
    kx, kw, kb = jax.random.split(key, 3)

    # PyTorch-equivalent NCHW input / OIHW weight; converted to NHWC / HWIO in
    # the wrapper (layout glue only).
    x_nchw = jax.random.normal(kx, (B, dim, H, W), jnp.float32)
    w_oihw = jax.random.normal(kw, (dim, dim, 3, 3), jnp.float32) * 0.02  # trunc_normal_(std=0.02) analogue
    bias = jax.random.normal(kb, (dim,), jnp.float32) * 0.01

    x_nhwc = jnp.transpose(x_nchw, (0, 2, 3, 1))
    w_hwio = jnp.transpose(w_oihw, (2, 3, 1, 0))

    # Pack parameters once, outside the forward path (review: per-call packing
    # is pure wrapper overhead).
    w_packed, b_tiled = make_ea_params(w_hwio, bias, W)
    w_packed = jax.block_until_ready(w_packed)

    out = ea_forward(x_nhwc, w_packed, b_tiled)   # grid=(2,), Bblk=2 per step
    out = jax.block_until_ready(out)

    # pure-JAX f32 reference: x * sigmoid(conv3x3_same(x) + b)
    ref_conv = jax.lax.conv_general_dilated(
        x_nhwc, w_hwio, window_strides=(1, 1), padding="SAME",
        dimension_numbers=("NHWC", "HWIO", "NHWC"))
    ref = x_nhwc * jax.nn.sigmoid(ref_conv + bias)

    assert out.shape == (B, H, W, dim) and out.dtype == jnp.float32
    err = float(jnp.max(jnp.abs(out - ref)))
    assert err < 2e-2, f"max abs err {err}"
    print("KERNEL_OK")
</pallas_src>

<mosaic_0001>
module attributes {stable_mosaic.version = 11 : i64} {
  func.func @ea_kernel(%arg0: i32, %arg1: memref<32x256xf32, #tpu.memory_space<vmem>>, %arg2: memref<256x768xbf16, #tpu.memory_space<vmem>>, %arg3: memref<1x256xf32, #tpu.memory_space<vmem>>, %arg4: memref<32x256xf32, #tpu.memory_space<vmem>>) attributes {dimension_semantics = [#tpu.dimension_semantics<parallel>], iteration_bounds = array<i64: 2>, scalar_prefetch = 0 : i64, scratch_operands = 0 : i64, tpu.core_type = #tpu.core_type<tc>, window_params = [{transform_indices = @transform_0, window_bounds = array<i64: 32, 256>}, {pipeline_mode = #tpu.pipeline_mode<synchronous>, transform_indices = @transform_1, window_bounds = array<i64: 256, 768>}, {pipeline_mode = #tpu.pipeline_mode<synchronous>, transform_indices = @transform_2, window_bounds = array<i64: 1, 256>}, {transform_indices = @transform_3, window_bounds = array<i64: 32, 256>}]} {
    %c0 = arith.constant 0 : index
    %c0_0 = arith.constant 0 : index
    %0 = vector.load %arg1[%c0, %c0_0] : memref<32x256xf32, #tpu.memory_space<vmem>>, vector<32x256xf32>
    %1 = arith.truncf %0 : vector<32x256xf32> to vector<32x256xbf16>
    %c0_1 = arith.constant 0 : index
    %c0_2 = arith.constant 0 : index
    %2 = vector.load %arg2[%c0_1, %c0_2] : memref<256x768xbf16, #tpu.memory_space<vmem>>, vector<256x768xbf16>
    %cst = arith.constant dense<0.000000e+00> : vector<32x768xf32>
    %3 = tpu.matmul %1, %2, %cst {dimension_numbers = #tpu.dot_dimension_numbers<[1], [0], [0], [1], [0, 0, 1, 1], [], []>} : vector<32x256xbf16>, vector<256x768xbf16>, vector<32x768xf32> -> vector<32x768xf32>
    %4 = tpu.iota {dimensions = array<i32: 0>} : vector<32x256xi32>
    %c16_i32 = arith.constant 16 : i32
    %c0_i32 = arith.constant 0 : i32
    %5 = arith.cmpi eq, %c16_i32, %c0_i32 : i32
    %c1_i32 = arith.constant 1 : i32
    %6 = arith.select %5, %c1_i32, %c16_i32 : i32
    %7 = vector.broadcast %6 : i32 to vector<32x256xi32>
    %8 = arith.remsi %4, %7 : vector<32x256xi32>
    %c0_i32_3 = arith.constant 0 : i32
    %9 = vector.broadcast %c0_i32_3 : i32 to vector<32x256xi32>
    %10 = arith.cmpi ne, %8, %9 : vector<32x256xi32>
    %c0_i32_4 = arith.constant 0 : i32
    %11 = vector.broadcast %c0_i32_4 : i32 to vector<32x256xi32>
    %12 = arith.cmpi slt, %8, %11 : vector<32x256xi32>
    %c0_i32_5 = arith.constant 0 : i32
    %13 = arith.cmpi slt, %6, %c0_i32_5 : i32
    %14 = vector.broadcast %13 : i1 to vector<32x256xi1>
    %15 = vector.broadcast %14 : vector<32x256xi1> to vector<32x256xi1>
    %16 = arith.xori %12, %15 : vector<32x256xi1>
    %17 = arith.andi %16, %10 : vector<32x256xi1>
    %18 = vector.broadcast %6 : i32 to vector<32x256xi32>
    %19 = arith.addi %8, %18 : vector<32x256xi32>
    %20 = arith.select %17, %19, %8 : vector<32x256xi1>, vector<32x256xi32>
    %21 = vector.extract_strided_slice %3 {offsets = [0, 256], sizes = [32, 256], strides = [1, 1]} : vector<32x768xf32> to vector<32x256xf32>
    %c0_6 = arith.constant 0 : index
    %c0_7 = arith.constant 0 : index
    %22 = vector.load %arg3[%c0_6, %c0_7] : memref<1x256xf32, #tpu.memory_space<vmem>>, vector<1x256xf32>
    %23 = vector.broadcast %22 : vector<1x256xf32> to vector<32x256xf32>
    %24 = arith.addf %21, %23 : vector<32x256xf32>
    %25 = vector.extract_strided_slice %3 {offsets = [0, 0], sizes = [32, 256], strides = [1, 1]} : vector<32x768xf32> to vector<32x256xf32>
    %c1_i32_8 = arith.constant 1 : i32
    %26 = tpu.dynamic_rotate %25 by %c1_i32_8 dim 0 : vector<32x256xf32>, i32 -> vector<32x256xf32>
    %c-1_i32 = arith.constant -1 : i32
    %27 = vector.broadcast %c-1_i32 : i32 to vector<32x256xi32>
    %28 = arith.addi %20, %27 : vector<32x256xi32>
    %c0_i32_9 = arith.constant 0 : i32
    %29 = vector.broadcast %c0_i32_9 : i32 to vector<32x256xi32>
    %30 = arith.cmpi sge, %28, %29 : vector<32x256xi32>
    %c-1_i32_10 = arith.constant -1 : i32
    %31 = vector.broadcast %c-1_i32_10 : i32 to vector<32x256xi32>
    %32 = arith.addi %20, %31 : vector<32x256xi32>
    %c16_i32_11 = arith.constant 16 : i32
    %33 = vector.broadcast %c16_i32_11 : i32 to vector<32x256xi32>
    %34 = arith.cmpi slt, %32, %33 : vector<32x256xi32>
    %35 = arith.andi %30, %34 : vector<32x256xi1>
    %cst_12 = arith.constant 0.000000e+00 : f32
    %36 = vector.broadcast %cst_12 : f32 to vector<32x256xf32>
    %37 = arith.select %35, %26, %36 : vector<32x256xi1>, vector<32x256xf32>
    %38 = arith.addf %24, %37 : vector<32x256xf32>
    %39 = vector.extract_strided_slice %3 {offsets = [0, 512], sizes = [32, 256], strides = [1, 1]} : vector<32x768xf32> to vector<32x256xf32>
    %c31_i32 = arith.constant 31 : i32
    %40 = tpu.dynamic_rotate %39 by %c31_i32 dim 0 : vector<32x256xf32>, i32 -> vector<32x256xf32>
    %c1_i32_13 = arith.constant 1 : i32
    %41 = vector.broadcast %c1_i32_13 : i32 to vector<32x256xi32>
    %42 = arith.addi %20, %41 : vector<32x256xi32>
    %c0_i32_14 = arith.constant 0 : i32
    %43 = vector.broadcast %c0_i32_14 : i32 to vector<32x256xi32>
    %44 = arith.cmpi sge, %42, %43 : vector<32x256xi32>
    %c1_i32_15 = arith.constant 1 : i32
    %45 = vector.broadcast %c1_i32_15 : i32 to vector<32x256xi32>
    %46 = arith.addi %20, %45 : vector<32x256xi32>
    %c16_i32_16 = arith.constant 16 : i32
    %47 = vector.broadcast %c16_i32_16 : i32 to vector<32x256xi32>
    %48 = arith.cmpi slt, %46, %47 : vector<32x256xi32>
    %49 = arith.andi %44, %48 : vector<32x256xi1>
    %cst_17 = arith.constant 0.000000e+00 : f32
    %50 = vector.broadcast %cst_17 : f32 to vector<32x256xf32>
    %51 = arith.select %49, %40, %50 : vector<32x256xi1>, vector<32x256xf32>
    %52 = arith.addf %38, %51 : vector<32x256xf32>
    %53 = arith.negf %52 : vector<32x256xf32>
    %54 = math.exp %53 : vector<32x256xf32>
    %cst_18 = arith.constant 1.000000e+00 : f32
    %55 = vector.broadcast %cst_18 : f32 to vector<32x256xf32>
    %56 = arith.addf %55, %54 : vector<32x256xf32>
    %57 = arith.divf %55, %56 : vector<32x256xf32>
    %58 = arith.mulf %0, %57 : vector<32x256xf32>
    %c0_19 = arith.constant 0 : index
    %c0_20 = arith.constant 0 : index
    %59 = vector.load %arg4[%c0_19, %c0_20] : memref<32x256xf32, #tpu.memory_space<vmem>>, vector<32x256xf32>
    tpu.vector_store %arg4[%c0_19, %c0_20], %58 {strides = array<i32>} : memref<32x256xf32, #tpu.memory_space<vmem>>, vector<32x256xf32>,
    return
  }
  func.func @transform_0(%arg0: i32) -> (i32, i32) {
    %c0_i32 = arith.constant 0 : i32
    %c0_i32_0 = arith.constant 0 : i32
    return %arg0, %c0_i32 : i32, i32
  }
  func.func @transform_1(%arg0: i32) -> (i32, i32) {
    %c0_i32 = arith.constant 0 : i32
    %c0_i32_0 = arith.constant 0 : i32
    %c0_i32_1 = arith.constant 0 : i32
    return %c0_i32, %c0_i32_0 : i32, i32
  }
  func.func @transform_2(%arg0: i32) -> (i32, i32) {
    %c0_i32 = arith.constant 0 : i32
    %c0_i32_0 = arith.constant 0 : i32
    %c0_i32_1 = arith.constant 0 : i32
    return %c0_i32, %c0_i32_0 : i32, i32
  }
  func.func @transform_3(%arg0: i32) -> (i32, i32) {
    %c0_i32 = arith.constant 0 : i32
    %c0_i32_0 = arith.constant 0 : i32
    return %arg0, %c0_i32 : i32, i32
  }
}

</mosaic_0001>

<llo_original>
// kernel: ea_forward.1
$region0: #{ea_forward.1}
  #allocation0 [shape = 'u32[]', space=smem, size = 0x4, offset = 0x4, fixed_abs, tag = 'smem constant byte address 0x4 - core index']
  #allocation1 [shape = 'u32[144,128]{1,0:T(1,128)}', space=vmem, size = 0x12000, scoped, tag = 'internal scratch']
  %s0 = inlined_call_operand.vmem [shape: f32[64,256], index: 0, kind: input, shape index: {}]
  %s1 = inlined_call_operand.vmem [shape: bf16[256,768], index: 1, kind: input, shape index: {}]
  %s2 = inlined_call_operand.vmem [shape: f32[1,256], index: 2, kind: input, shape index: {}]
  %s3 = inlined_call_operand.vmem [shape: f32[64,256], index: 3, kind: output, shape index: {}]
  %s4 = sld [smem:[#allocation0]]
  $region45: #{ea_forward.1} parent=0
    _
  %s6 = ssub.s32 1, %s4
  %s7 = scalar_select 0, %s6, %s4
  loop: start=0, step=1, limit=4
  $region2: #{ea_forward.1} parent=0 // loop_pre_header
    _
  $region3: #{ea_forward.1} parent=0 // loop_header
    %s9 = sphi 0, %s13
    %p10 = scmp.ge.s32.totalorder %s9, 4
    %s19 = sphi 0, %s21
    %s22 = sphi 0, %s19
    %s23 = sphi 0, %s22
    %s39 = sphi 0, %s23
    %s43 = sphi 0, %s43
    %s45 = sphi 0, %s43
    %s46 = sphi 0, %s45
    %s60 = sphi 0, %s46
    %s64 = sphi 0, %s64
    %s66 = sphi 0, %s64
    %s67 = sphi 0, %s66
    %s81 = sphi 0, %s67
    %s87 = sphi 0, %s89
    %s90 = sphi 0, %s87
    %s91 = sphi 0, %s90
    %s107 = sphi 0, %s91
  $region4: #{ea_forward.1} parent=0 // loop_header_branch
    %12 = sbr.rel (%p10) target = $region8
  $region5: #{ea_forward.1} parent=0 // loop_body
    %s14 = ssub.s32 %s9, 1
    %s15 = ssub.s32 %s9, 2
    %s16 = sadd.s32 %s9, 1
    %s17 = ssub.s32 %s9, %s16
    %p18 = scmp.eq.s32.totalorder %s17, 0
    %s20 = sadd.s32 %s19, 1
    %s21 = scalar_select %p18, %s19, %s20
    %p24 = pneg %p18
    %p25 = scmp.eq.s32.totalorder %s9, 1
    %p26 = por %p24, %p25
    %p27 = scmp.ne.s32.totalorder %s19, %s22
    %p28 = scmp.eq.s32.totalorder %s9, 0
    %p29 = por %p27, %p28
    %p30 = scmp.ne.s32.totalorder %s19, %s22
    %p31 = scmp.eq.s32.totalorder %s14, 1
    %p32 = por %p30, %p31
    %p33 = scmp.ne.s32.totalorder %s22, %s23
    %p34 = scmp.eq.s32.totalorder %s14, 0
    %p35 = por %p33, %p34
    %p36 = scmp.ne.s32.totalorder %s22, %s23
    %p37 = scmp.eq.s32.totalorder %s15, 1
    %p38 = por %p36, %p37
    %p40 = scmp.ne.s32.totalorder %s23, %s39
    %p41 = scmp.eq.s32.totalorder %s15, 0
    %p42 = por %p40, %p41
    %s44 = sadd.s32 %s43, 1
    %p47 = scmp.eq.s32.totalorder %s9, 1
    %p48 = scmp.ne.s32.totalorder %s43, %s45
    %p49 = scmp.eq.s32.totalorder %s9, 0
    %p50 = por %p48, %p49
    %p51 = scmp.ne.s32.totalorder %s43, %s45
    %p52 = scmp.eq.s32.totalorder %s14, 1
    %p53 = por %p51, %p52
    %p54 = scmp.ne.s32.totalorder %s45, %s46
    %p55 = scmp.eq.s32.totalorder %s14, 0
    %p56 = por %p54, %p55
    %p57 = scmp.ne.s32.totalorder %s45, %s46
    %p58 = scmp.eq.s32.totalorder %s15, 1
    %p59 = por %p57, %p58
    %p61 = scmp.ne.s32.totalorder %s46, %s60
    %p62 = scmp.eq.s32.totalorder %s15, 0
    %p63 = por %p61, %p62
    %s65 = sadd.s32 %s64, 1
    %p68 = scmp.eq.s32.totalorder %s9, 1
    %p69 = scmp.ne.s32.totalorder %s64, %s66
    %p70 = scmp.eq.s32.totalorder %s9, 0
    %p71 = por %p69, %p70
    %p72 = scmp.ne.s32.totalorder %s64, %s66
    %p73 = scmp.eq.s32.totalorder %s14, 1
    %p74 = por %p72, %p73
    %p75 = scmp.ne.s32.totalorder %s66, %s67
    %p76 = scmp.eq.s32.totalorder %s14, 0
    %p77 = por %p75, %p76
    %p78 = scmp.ne.s32.totalorder %s66, %s67
    %p79 = scmp.eq.s32.totalorder %s15, 1
    %p80 = por %p78, %p79
    %p82 = scmp.ne.s32.totalorder %s67, %s81
    %p83 = scmp.eq.s32.totalorder %s15, 0
    %p84 = por %p82, %p83
    %s85 = ssub.s32 %s9, %s16
    %p86 = scmp.eq.s32.totalorder %s85, 0
    %s88 = sadd.s32 %s87, 1
    %s89 = scalar_select %p86, %s87, %s88
    %p92 = pneg %p86
    %p93 = scmp.eq.s32.totalorder %s9, 1
    %p94 = por %p92, %p93
    %p95 = scmp.ne.s32.totalorder %s87, %s90
    %p96 = scmp.eq.s32.totalorder %s9, 0
    %p97 = por %p95, %p96
    %p98 = scmp.ne.s32.totalorder %s87, %s90
    %p99 = scmp.eq.s32.totalorder %s14, 1
    %p100 = por %p98, %p99
    %p101 = scmp.ne.s32.totalorder %s90, %s91
    %p102 = scmp.eq.s32.totalorder %s14, 0
    %p103 = por %p101, %p102
    %p104 = scmp.ne.s32.totalorder %s90, %s91
    %p105 = scmp.eq.s32.totalorder %s15, 1
    %p106 = por %p104, %p105
    %p108 = scmp.ne.s32.totalorder %s91, %s107
    %p109 = scmp.eq.s32.totalorder %s15, 0
    %p110 = por %p108, %p109
    %p111 = scmp.le.s32.totalorder 1, %s9
    %p112 = scmp.lt.s32.totalorder %s9, 3
    %p113 = pnand %p111, %p112
    %p114 = pneg %p113
    // Predicated region
    $region9: #{ea_forward.1} parent=5 // pred_check
      _
    $region10: #{ea_forward.1} parent=5 // pred_check_branch
      %116 = sbr.rel (%p113) target = $region12
    $region11: #{ea_forward.1} parent=5 // pred_region
      %s117 = ssub.s32 %s9, 1
      // Predicated region
      $region13: #{ea_forward.1} parent=11 // pred_check
        %p118 = pneg %p56
      $region14: #{ea_forward.1} parent=11 // pred_check_branch
        %120 = sbr.rel (%p118) target = $region16
      $region15: #{ea_forward.1} parent=11 // pred_region
        _
      $region16: #{ea_forward.1} parent=11 // pred_fallthru
        _
      // Predicated region
      $region17: #{ea_forward.1} parent=11 // pred_check
        %p121 = pneg %p77
      $region18: #{ea_forward.1} parent=11 // pred_check_branch
        %123 = sbr.rel (%p121) target = $region20
      $region19: #{ea_forward.1} parent=11 // pred_region
        _
      $region20: #{ea_forward.1} parent=11 // pred_fallthru
        _
    $region12: #{ea_forward.1} parent=5 // pred_fallthru
      _
    %p124 = scmp.lt.s32.totalorder %s9, 2
    // Predicated region
    $region21: #{ea_forward.1} parent=5 // pred_check
      %p125 = pneg %p124
    $region22: #{ea_forward.1} parent=5 // pred_check_branch
      %127 = sbr.rel (%p125) target = $region24
    $region23: #{ea_forward.1} parent=5 // pred_region
      // Predicated region
      $region25: #{ea_forward.1} parent=23 // pred_check
        %p128 = pneg %p29
      $region26: #{ea_forward.1} parent=23 // pred_check_branch
        %130 = sbr.rel (%p128) target = $region28
      $region27: #{ea_forward.1} parent=23 // pred_region
        %s131 = smul.u32 4, %s9
        %p132 = scmp.lt.s32.totalorder %s131, 7
        %s133 = scalar_select %p132, %s131, 7
        %s134 = smul.addr %s133, 2
        %s135 = smul.addr %s134, 8
        %s136 = scalar_lea.vmem %s0, %s135
        %s137 = smul.u32 4, %s9
      $region28: #{ea_forward.1} parent=23 // pred_fallthru
        _
    $region24: #{ea_forward.1} parent=5 // pred_fallthru
      _
    %p138 = scmp.le.s32.totalorder 1, %s9
    %p139 = scmp.lt.s32.totalorder %s9, 3
    %p140 = pnand %p138, %p139
    %p141 = pneg %p140
    // Predicated region
    $region29: #{ea_forward.1} parent=5 // pred_check
      _
    $region30: #{ea_forward.1} parent=5 // pred_check_branch
      %143 = sbr.rel (%p140) target = $region32
    $region31: #{ea_forward.1} parent=5 // pred_region
      %s144 = ssub.s32 %s9, 1
      %s145 = smul.u32 4, %s14
      %p146 = scmp.lt.s32.totalorder %s145, 7
      %s147 = scalar_select %p146, %s145, 7
      %s148 = smul.addr %s147, 2
      %s149 = smul.addr %s148, 8
      %s150 = scalar_lea.vmem %s0, %s149
      %p151 = pneg %p35
      %p152 = pneg %p32
      %p153 = pneg %p56
      %p154 = pneg %p53
      %p155 = pneg %p77
      %p156 = pneg %p74
      %p157 = pneg %p103
      %p158 = pneg %p100
      %s159 = smul.u32 4, %s14
      %p160 = scmp.lt.s32.totalorder %s159, 7
      %s161 = scalar_select %p160, %s159, 7
      %s162 = smul.addr %s161, 2
      %s163 = smul.addr %s162, 8
      %s164 = scalar_lea.vmem %s3, %s163
      %s165 = smul.u32 4, %s14
      %p166 = scmp.lt.s32.totalorder %s165, 7
      %s167 = scalar_select %p166, %s165, 7
      %s168 = smul.addr %s167, 2
      %s169 = smul.addr %s168, 8
      %s170 = scalar_lea.vmem %s0, %s169
      %s171 = smul.u32 4, %s14
      %s172 = smul.u32 4, %s14
      %p173 = scmp.lt.s32.totalorder %s172, 7
      %s174 = scalar_select %p173, %s172, 7
      %s175 = smul.addr %s174, 2
      %s176 = smul.addr %s175, 8
      %s177 = scalar_lea.vmem %s3, %s176
      %s178 = smul.u32 4, %s14
      %v179 = vld [vmem:[%s170] sm:$0xff]
      %v180 = vld [vmem:[%s170 + $0x8] sm:$0xff]
      %v181 = vld [vmem:[%s170 + $0x10] sm:$0xff]
      %v182 = vld [vmem:[%s170 + $0x18] sm:$0xff]
      %v183 = vld [vmem:[%s170 + $0x20] sm:$0xff]
      %v184 = vld [vmem:[%s170 + $0x28] sm:$0xff]
      %v185 = vld [vmem:[%s170 + $0x30] sm:$0xff]
      %v186 = vld [vmem:[%s170 + $0x38] sm:$0xff]
      %v187 = vpack.c.bf16 %v181, %v179
      %v188 = vpack.c.bf16 %v182, %v180
      %v189 = vpack.c.bf16 %v185, %v183
      %v190 = vpack.c.bf16 %v186, %v184
      %v191 = vld [vmem:[%s1] sm:$0xff]
      %v192 = vld [vmem:[%s1 + $0x8] sm:$0xff]
      %v193 = vld [vmem:[%s1 + $0x10] sm:$0xff]
      %v194 = vld [vmem:[%s1 + $0x18] sm:$0xff]
      %v195 = vld [vmem:[%s1 + $0x20] sm:$0xff]
      %v196 = vld [vmem:[%s1 + $0x28] sm:$0xff]
      %v197 = vld [vmem:[%s1 + $0x30] sm:$0xff]
      %v198 = vld [vmem:[%s1 + $0x38] sm:$0xff]
      %v199 = vld [vmem:[%s1 + $0x40] sm:$0xff]
      %v200 = vld [vmem:[%s1 + $0x48] sm:$0xff]
      %v201 = vld [vmem:[%s1 + $0x50] sm:$0xff]
      %v202 = vld [vmem:[%s1 + $0x58] sm:$0xff]
      %v203 = vld [vmem:[%s1 + $0x60] sm:$0xff]
      %v204 = vld [vmem:[%s1 + $0x68] sm:$0xff]
      %v205 = vld [vmem:[%s1 + $0x70] sm:$0xff]
      %v206 = vld [vmem:[%s1 + $0x78] sm:$0xff]
      %v207 = vld [vmem:[%s1 + $0x80] sm:$0xff]
      %v208 = vld [vmem:[%s1 + $0x88] sm:$0xff]
      %v209 = vld [vmem:[%s1 + $0x90] sm:$0xff]
      %v210 = vld [vmem:[%s1 + $0x98] sm:$0xff]
      %v211 = vld [vmem:[%s1 + $0xa0] sm:$0xff]
      %v212 = vld [vmem:[%s1 + $0xa8] sm:$0xff]
      %v213 = vld [vmem:[%s1 + $0xb0] sm:$0xff]
      %v214 = vld [vmem:[%s1 + $0xb8] sm:$0xff]
      %v215 = vld [vmem:[%s1 + $0xc0] sm:$0xff]
      %v216 = vld [vmem:[%s1 + $0xc8] sm:$0xff]
      %v217 = vld [vmem:[%s1 + $0xd0] sm:$0xff]
      %v218 = vld [vmem:[%s1 + $0xd8] sm:$0xff]
      %v219 = vld [vmem:[%s1 + $0xe0] sm:$0xff]
      %v220 = vld [vmem:[%s1 + $0xe8] sm:$0xff]
      %v221 = vld [vmem:[%s1 + $0xf0] sm:$0xff]
      %v222 = vld [vmem:[%s1 + $0xf8] sm:$0xff]
      %v223 = vld [vmem:[%s1 + $0x100] sm:$0xff]
      %v224 = vld [vmem:[%s1 + $0x108] sm:$0xff]
      %v225 = vld [vmem:[%s1 + $0x110] sm:$0xff]
      %v226 = vld [vmem:[%s1 + $0x118] sm:$0xff]
      %v227 = vld [vmem:[%s1 + $0x120] sm:$0xff]
      %v228 = vld [vmem:[%s1 + $0x128] sm:$0xff]
      %v229 = vld [vmem:[%s1 + $0x130] sm:$0xff]
      %v230 = vld [vmem:[%s1 + $0x138] sm:$0xff]
      %v231 = vld [vmem:[%s1 + $0x140] sm:$0xff]
      %v232 = vld [vmem:[%s1 + $0x148] sm:$0xff]
      %v233 = vld [vmem:[%s1 + $0x150] sm:$0xff]
      %v234 = vld [vmem:[%s1 + $0x158] sm:$0xff]
      %v235 = vld [vmem:[%s1 + $0x160] sm:$0xff]
      %v236 = vld [vmem:[%s1 + $0x168] sm:$0xff]
      %v237 = vld [vmem:[%s1 + $0x170] sm:$0xff]
      %v238 = vld [vmem:[%s1 + $0x178] sm:$0xff]
      %v239 = vld [vmem:[%s1 + $0x180] sm:$0xff]
      %v240 = vld [vmem:[%s1 + $0x188] sm:$0xff]
      %v241 = vld [vmem:[%s1 + $0x190] sm:$0xff]
      %v242 = vld [vmem:[%s1 + $0x198] sm:$0xff]
      %v243 = vld [vmem:[%s1 + $0x1a0] sm:$0xff]
      %v244 = vld [vmem:[%s1 + $0x1a8] sm:$0xff]
      %v245 = vld [vmem:[%s1 + $0x1b0] sm:$0xff]
      %v246 = vld [vmem:[%s1 + $0x1b8] sm:$0xff]
      %v247 = vld [vmem:[%s1 + $0x1c0] sm:$0xff]
      %v248 = vld [vmem:[%s1 + $0x1c8] sm:$0xff]
      %v249 = vld [vmem:[%s1 + $0x1d0] sm:$0xff]
      %v250 = vld [vmem:[%s1 + $0x1d8] sm:$0xff]
      %v251 = vld [vmem:[%s1 + $0x1e0] sm:$0xff]
      %v252 = vld [vmem:[%s1 + $0x1e8] sm:$0xff]
      %v253 = vld [vmem:[%s1 + $0x1f0] sm:$0xff]
      %v254 = vld [vmem:[%s1 + $0x1f8] sm:$0xff]
      %v255 = vld [vmem:[%s1 + $0x200] sm:$0xff]
      %v256 = vld [vmem:[%s1 + $0x208] sm:$0xff]
      %v257 = vld [vmem:[%s1 + $0x210] sm:$0xff]
      %v258 = vld [vmem:[%s1 + $0x218] sm:$0xff]
      %v259 = vld [vmem:[%s1 + $0x220] sm:$0xff]
      %v260 = vld [vmem:[%s1 + $0x228] sm:$0xff]
      %v261 = vld [vmem:[%s1 + $0x230] sm:$0xff]
      %v262 = vld [vmem:[%s1 + $0x238] sm:$0xff]
      %v263 = vld [vmem:[%s1 + $0x240] sm:$0xff]
      %v264 = vld [vmem:[%s1 + $0x248] sm:$0xff]
      %v265 = vld [vmem:[%s1 + $0x250] sm:$0xff]
      %v266 = vld [vmem:[%s1 + $0x258] sm:$0xff]
      %v267 = vld [vmem:[%s1 + $0x260] sm:$0xff]
      %v268 = vld [vmem:[%s1 + $0x268] sm:$0xff]
      %v269 = vld [vmem:[%s1 + $0x270] sm:$0xff]
      %v270 = vld [vmem:[%s1 + $0x278] sm:$0xff]
      %v271 = vld [vmem:[%s1 + $0x280] sm:$0xff]
      %v272 = vld [vmem:[%s1 + $0x288] sm:$0xff]
      %v273 = vld [vmem:[%s1 + $0x290] sm:$0xff]
      %v274 = vld [vmem:[%s1 + $0x298] sm:$0xff]
      %v275 = vld [vmem:[%s1 + $0x2a0] sm:$0xff]
      %v276 = vld [vmem:[%s1 + $0x2a8] sm:$0xff]
      %v277 = vld [vmem:[%s1 + $0x2b0] sm:$0xff]
      %v278 = vld [vmem:[%s1 + $0x2b8] sm:$0xff]
      %v279 = vld [vmem:[%s1 + $0x2c0] sm:$0xff]
      %v280 = vld [vmem:[%s1 + $0x2c8] sm:$0xff]
      %v281 = vld [vmem:[%s1 + $0x2d0] sm:$0xff]
      %v282 = vld [vmem:[%s1 + $0x2d8] sm:$0xff]
      %v283 = vld [vmem:[%s1 + $0x2e0] sm:$0xff]
      %v284 = vld [vmem:[%s1 + $0x2e8] sm:$0xff]
      %v285 = vld [vmem:[%s1 + $0x2f0] sm:$0xff]
      %v286 = vld [vmem:[%s1 + $0x2f8] sm:$0xff]
      %v383 = vunpack.c.l.b16 %v191
      %v384 = vunpack.c.h.b16 %v191
      %v385 = vunpack.c.l.b16 %v192
      %v386 = vunpack.c.h.b16 %v192
      %v387 = vunpack.c.l.b16 %v193
      %v388 = vunpack.c.h.b16 %v193
      %v389 = vunpack.c.l.b16 %v194
      %v390 = vunpack.c.h.b16 %v194
      %v391 = vunpack.c.l.b16 %v195
      %v392 = vunpack.c.h.b16 %v195
      %v393 = vunpack.c.l.b16 %v196
      %v394 = vunpack.c.h.b16 %v196
      %v395 = vunpack.c.l.b16 %v197
      %v396 = vunpack.c.h.b16 %v197
      %v397 = vunpack.c.l.b16 %v198
      %v398 = vunpack.c.h.b16 %v198
      %v399 = vunpack.c.l.b16 %v199
      %v400 = vunpack.c.h.b16 %v199
      %v401 = vunpack.c.l.b16 %v200
      %v402 = vunpack.c.h.b16 %v200
      %v403 = vunpack.c.l.b16 %v201
      %v404 = vunpack.c.h.b16 %v201
      %v405 = vunpack.c.l.b16 %v202
      %v406 = vunpack.c.h.b16 %v202
      %v407 = vunpack.c.l.b16 %v203
      %v408 = vunpack.c.h.b16 %v203
      %v409 = vunpack.c.l.b16 %v204
      %v410 = vunpack.c.h.b16 %v204
      %v411 = vunpack.c.l.b16 %v205
      %v412 = vunpack.c.h.b16 %v205
      %v413 = vunpack.c.l.b16 %v206
      %v414 = vunpack.c.h.b16 %v206
      %v415 = vunpack.c.l.b16 %v207
      %v416 = vunpack.c.h.b16 %v207
      %v417 = vunpack.c.l.b16 %v208
      %v418 = vunpack.c.h.b16 %v208
      %v419 = vunpack.c.l.b16 %v209
      %v420 = vunpack.c.h.b16 %v209
      %v421 = vunpack.c.l.b16 %v210
      %v422 = vunpack.c.h.b16 %v210
      %v423 = vunpack.c.l.b16 %v211
      %v424 = vunpack.c.h.b16 %v211
      %v425 = vunpack.c.l.b16 %v212
      %v426 = vunpack.c.h.b16 %v212
      %v427 = vunpack.c.l.b16 %v213
      %v428 = vunpack.c.h.b16 %v213
      %v429 = vunpack.c.l.b16 %v214
      %v430 = vunpack.c.h.b16 %v214
      %v431 = vunpack.c.l.b16 %v215
      %v432 = vunpack.c.h.b16 %v215
      %v433 = vunpack.c.l.b16 %v216
      %v434 = vunpack.c.h.b16 %v216
      %v435 = vunpack.c.l.b16 %v217
      %v436 = vunpack.c.h.b16 %v217
      %v437 = vunpack.c.l.b16 %v218
      %v438 = vunpack.c.h.b16 %v218
      %v439 = vunpack.c.l.b16 %v219
      %v440 = vunpack.c.h.b16 %v219
      %v441 = vunpack.c.l.b16 %v220
      %v442 = vunpack.c.h.b16 %v220
      %v443 = vunpack.c.l.b16 %v221
      %v444 = vunpack.c.h.b16 %v221
      %v445 = vunpack.c.l.b16 %v222
      %v446 = vunpack.c.h.b16 %v222
      %v447 = vunpack.c.l.b16 %v223
      %v448 = vunpack.c.h.b16 %v223
      %v449 = vunpack.c.l.b16 %v224
      %v450 = vunpack.c.h.b16 %v224
      %v451 = vunpack.c.l.b16 %v225
      %v452 = vunpack.c.h.b16 %v225
      %v453 = vunpack.c.l.b16 %v226
      %v454 = vunpack.c.h.b16 %v226
      %v455 = vunpack.c.l.b16 %v227
      %v456 = vunpack.c.h.b16 %v227
      %v457 = vunpack.c.l.b16 %v228
      %v458 = vunpack.c.h.b16 %v228
      %v459 = vunpack.c.l.b16 %v229
      %v460 = vunpack.c.h.b16 %v229
      %v461 = vunpack.c.l.b16 %v230
      %v462 = vunpack.c.h.b16 %v230
      %v463 = vunpack.c.l.b16 %v231
      %v464 = vunpack.c.h.b16 %v231
      %v465 = vunpack.c.l.b16 %v232
      %v466 = vunpack.c.h.b16 %v232
      %v467 = vunpack.c.l.b16 %v233
      %v468 = vunpack.c.h.b16 %v233
      %v469 = vunpack.c.l.b16 %v234
      %v470 = vunpack.c.h.b16 %v234
      %v471 = vunpack.c.l.b16 %v235
      %v472 = vunpack.c.h.b16 %v235
      %v473 = vunpack.c.l.b16 %v236
      %v474 = vunpack.c.h.b16 %v236
      %v475 = vunpack.c.l.b16 %v237
      %v476 = vunpack.c.h.b16 %v237
      %v477 = vunpack.c.l.b16 %v238
      %v478 = vunpack.c.h.b16 %v238
      %v479 = vunpack.c.l.b16 %v239
      %v480 = vunpack.c.h.b16 %v239
      %v481 = vunpack.c.l.b16 %v240
      %v482 = vunpack.c.h.b16 %v240
      %v483 = vunpack.c.l.b16 %v241
      %v484 = vunpack.c.h.b16 %v241
      %v485 = vunpack.c.l.b16 %v242
      %v486 = vunpack.c.h.b16 %v242
      %v487 = vunpack.c.l.b16 %v243
      %v488 = vunpack.c.h.b16 %v243
      %v489 = vunpack.c.l.b16 %v244
      %v490 = vunpack.c.h.b16 %v244
      %v491 = vunpack.c.l.b16 %v245
      %v492 = vunpack.c.h.b16 %v245
      %v493 = vunpack.c.l.b16 %v246
      %v494 = vunpack.c.h.b16 %v246
      %v495 = vunpack.c.l.b16 %v247
      %v496 = vunpack.c.h.b16 %v247
      %v497 = vunpack.c.l.b16 %v248
      %v498 = vunpack.c.h.b16 %v248
      %v499 = vunpack.c.l.b16 %v249
      %v500 = vunpack.c.h.b16 %v249
      %v501 = vunpack.c.l.b16 %v250
      %v502 = vunpack.c.h.b16 %v250
      %v503 = vunpack.c.l.b16 %v251
      %v504 = vunpack.c.h.b16 %v251
      %v505 = vunpack.c.l.b16 %v252
      %v506 = vunpack.c.h.b16 %v252
      %v507 = vunpack.c.l.b16 %v253
      %v508 = vunpack.c.h.b16 %v253
      %v509 = vunpack.c.l.b16 %v254
      %v510 = vunpack.c.h.b16 %v254
      %v511 = vunpack.c.l.b16 %v255
      %v512 = vunpack.c.h.b16 %v255
      %v513 = vunpack.c.l.b16 %v256
      %v514 = vunpack.c.h.b16 %v256
      %v515 = vunpack.c.l.b16 %v257
      %v516 = vunpack.c.h.b16 %v257
      %v517 = vunpack.c.l.b16 %v258
      %v518 = vunpack.c.h.b16 %v258
      %v519 = vunpack.c.l.b16 %v259
      %v520 = vunpack.c.h.b16 %v259
      %v521 = vunpack.c.l.b16 %v260
      %v522 = vunpack.c.h.b16 %v260
      %v523 = vunpack.c.l.b16 %v261
      %v524 = vunpack.c.h.b16 %v261
      %v525 = vunpack.c.l.b16 %v262
      %v526 = vunpack.c.h.b16 %v262
      %v527 = vunpack.c.l.b16 %v263
      %v528 = vunpack.c.h.b16 %v263
      %v529 = vunpack.c.l.b16 %v264
      %v530 = vunpack.c.h.b16 %v264
      %v531 = vunpack.c.l.b16 %v265
      %v532 = vunpack.c.h.b16 %v265
      %v533 = vunpack.c.l.b16 %v266
      %v534 = vunpack.c.h.b16 %v266
      %v535 = vunpack.c.l.b16 %v267
      %v536 = vunpack.c.h.b16 %v267
      %v537 = vunpack.c.l.b16 %v268
      %v538 = vunpack.c.h.b16 %v268
      %v539 = vunpack.c.l.b16 %v269
      %v540 = vunpack.c.h.b16 %v269
      %v541 = vunpack.c.l.b16 %v270
      %v542 = vunpack.c.h.b16 %v270
      %v543 = vunpack.c.l.b16 %v271
      %v544 = vunpack.c.h.b16 %v271
      %v545 = vunpack.c.l.b16 %v272
      %v546 = vunpack.c.h.b16 %v272
      %v547 = vunpack.c.l.b16 %v273
      %v548 = vunpack.c.h.b16 %v273
      %v549 = vunpack.c.l.b16 %v274
      %v550 = vunpack.c.h.b16 %v274
      %v551 = vunpack.c.l.b16 %v275
      %v552 = vunpack.c.h.b16 %v275
      %v553 = vunpack.c.l.b16 %v276
      %v554 = vunpack.c.h.b16 %v276
      %v555 = vunpack.c.l.b16 %v277
      %v556 = vunpack.c.h.b16 %v277
      %v557 = vunpack.c.l.b16 %v278
      %v558 = vunpack.c.h.b16 %v278
      %v559 = vunpack.c.l.b16 %v279
      %v560 = vunpack.c.h.b16 %v279
      %v561 = vunpack.c.l.b16 %v280
      %v562 = vunpack.c.h.b16 %v280
      %v563 = vunpack.c.l.b16 %v281
      %v564 = vunpack.c.h.b16 %v281
      %v565 = vunpack.c.l.b16 %v282
      %v566 = vunpack.c.h.b16 %v282
      %v567 = vunpack.c.l.b16 %v283
      %v568 = vunpack.c.h.b16 %v283
      %v569 = vunpack.c.l.b16 %v284
      %v570 = vunpack.c.h.b16 %v284
      %v571 = vunpack.c.l.b16 %v285
      %v572 = vunpack.c.h.b16 %v285
      %v573 = vunpack.c.l.b16 %v286
      %v574 = vunpack.c.h.b16 %v286
      %v575 = vpack.c.b16 %v389, %v383
      %v576 = vpack.c.b16 %v390, %v384
      %v577 = vpack.c.b16 %v391, %v385
      %v578 = vpack.c.b16 %v392, %v386
      %v579 = vpack.c.b16 %v393, %v387
      %v580 = vpack.c.b16 %v394, %v388
      %v581 = vpack.c.b16 %v401, %v395
      %v582 = vpack.c.b16 %v402, %v396
      %v583 = vpack.c.b16 %v403, %v397
      %v584 = vpack.c.b16 %v404, %v398
      %v585 = vpack.c.b16 %v405, %v399
      %v586 = vpack.c.b16 %v406, %v400
      %v587 = vpack.c.b16 %v413, %v407
      %v588 = vpack.c.b16 %v414, %v408
      %v589 = vpack.c.b16 %v415, %v409
      %v590 = vpack.c.b16 %v416, %v410
      %v591 = vpack.c.b16 %v417, %v411
      %v592 = vpack.c.b16 %v418, %v412
      %v593 = vpack.c.b16 %v425, %v419
      %v594 = vpack.c.b16 %v426, %v420
      %v595 = vpack.c.b16 %v427, %v421
      %v596 = vpack.c.b16 %v428, %v422
      %v597 = vpack.c.b16 %v429, %v423
      %v598 = vpack.c.b16 %v430, %v424
      %v599 = vpack.c.b16 %v437, %v431
      %v600 = vpack.c.b16 %v438, %v432
      %v601 = vpack.c.b16 %v439, %v433
      %v602 = vpack.c.b16 %v440, %v434
      %v603 = vpack.c.b16 %v441, %v435
      %v604 = vpack.c.b16 %v442, %v436
      %v605 = vpack.c.b16 %v449, %v443
      %v606 = vpack.c.b16 %v450, %v444
      %v607 = vpack.c.b16 %v451, %v445
      %v608 = vpack.c.b16 %v452, %v446
      %v609 = vpack.c.b16 %v453, %v447
      %v610 = vpack.c.b16 %v454, %v448
      %v611 = vpack.c.b16 %v461, %v455
      %v612 = vpack.c.b16 %v462, %v456
      %v613 = vpack.c.b16 %v463, %v457
      %v614 = vpack.c.b16 %v464, %v458
      %v615 = vpack.c.b16 %v465, %v459
      %v616 = vpack.c.b16 %v466, %v460
      %v617 = vpack.c.b16 %v473, %v467
      %v618 = vpack.c.b16 %v474, %v468
      %v619 = vpack.c.b16 %v475, %v469
      %v620 = vpack.c.b16 %v476, %v470
      %v621 = vpack.c.b16 %v477, %v471
      %v622 = vpack.c.b16 %v478, %v472
      %v623 = vpack.c.b16 %v485, %v479
      %v624 = vpack.c.b16 %v486, %v480
      %v625 = vpack.c.b16 %v487, %v481
      %v626 = vpack.c.b16 %v488, %v482
      %v627 = vpack.c.b16 %v489, %v483
      %v628 = vpack.c.b16 %v490, %v484
      %v629 = vpack.c.b16 %v497, %v491
      %v630 = vpack.c.b16 %v498, %v492
      %v631 = vpack.c.b16 %v499, %v493
      %v632 = vpack.c.b16 %v500, %v494
      %v633 = vpack.c.b16 %v501, %v495
      %v634 = vpack.c.b16 %v502, %v496
      %v635 = vpack.c.b16 %v509, %v503
      %v636 = vpack.c.b16 %v510, %v504
      %v637 = vpack.c.b16 %v511, %v505
      %v638 = vpack.c.b16 %v512, %v506
      %v639 = vpack.c.b16 %v513, %v507
      %v640 = vpack.c.b16 %v514, %v508
      %v641 = vpack.c.b16 %v521, %v515
      %v642 = vpack.c.b16 %v522, %v516
      %v643 = vpack.c.b16 %v523, %v517
      %v644 = vpack.c.b16 %v524, %v518
      %v645 = vpack.c.b16 %v525, %v519
      %v646 = vpack.c.b16 %v526, %v520
      %v647 = vpack.c.b16 %v533, %v527
      %v648 = vpack.c.b16 %v534, %v528
      %v649 = vpack.c.b16 %v535, %v529
      %v650 = vpack.c.b16 %v536, %v530
      %v651 = vpack.c.b16 %v537, %v531
      %v652 = vpack.c.b16 %v538, %v532
      %v653 = vpack.c.b16 %v545, %v539
      %v654 = vpack.c.b16 %v546, %v540
      %v655 = vpack.c.b16 %v547, %v541
      %v656 = vpack.c.b16 %v548, %v542
      %v657 = vpack.c.b16 %v549, %v543
      %v658 = vpack.c.b16 %v550, %v544
      %v659 = vpack.c.b16 %v557, %v551
      %v660 = vpack.c.b16 %v558, %v552
      %v661 = vpack.c.b16 %v559, %v553
      %v662 = vpack.c.b16 %v560, %v554
      %v663 = vpack.c.b16 %v561, %v555
      %v664 = vpack.c.b16 %v562, %v556
      %v665 = vpack.c.b16 %v569, %v563
      %v666 = vpack.c.b16 %v570, %v564
      %v667 = vpack.c.b16 %v571, %v565
      %v668 = vpack.c.b16 %v572, %v566
      %v669 = vpack.c.b16 %v573, %v567
      %v670 = vpack.c.b16 %v574, %v568
      %767 = vmatprep.subr.bf16.mxu0 %v618
      %768 = vmatpush1.bf16.msra.mxu0 %v617
      %769 = vmatprep.subr.bf16.mxu0 %v612
      %770 = vmatpush1.bf16.msra.mxu0 %v611
      %771 = vmatprep.subr.bf16.mxu0 %v606
      %772 = vmatpush1.bf16.msra.mxu0 %v605
      %773 = vmatprep.subr.bf16.mxu0 %v600
      %774 = vmatpush1.bf16.msra.mxu0 %v599
      %775 = vmatprep.subr.bf16.mxu0 %v594
      %776 = vmatpush1.bf16.msra.mxu0 %v593
      %777 = vmatprep.subr.bf16.mxu0 %v588
      %778 = vmatpush1.bf16.msra.mxu0 %v587
      %779 = vmatprep.subr.bf16.mxu0 %v582
      %780 = vmatpush1.bf16.msra.mxu0 %v581
      %781 = vmatprep.subr.bf16.mxu0 %v576
      %782 = vmatpush1.bf16.msra.mxu0 %v575
      %783 = vmatprep.subr.bf16.mxu0 %v666
      %784 = vmatpush2.bf16.msra.mxu0 %v665
      %785 = vmatprep.subr.bf16.mxu0 %v660
      %786 = vmatpush2.bf16.msra.mxu0 %v659
      %787 = vmatprep.subr.bf16.mxu0 %v654
      %788 = vmatpush2.bf16.msra.mxu0 %v653
      %789 = vmatprep.subr.bf16.mxu0 %v648
      %790 = vmatpush2.bf16.msra.mxu0 %v647
      %791 = vmatprep.subr.bf16.mxu0 %v642
      %792 = vmatpush2.bf16.msra.mxu0 %v641
      %793 = vmatprep.subr.bf16.mxu0 %v636
      %794 = vmatpush2.bf16.msra.mxu0 %v635
      %795 = vmatprep.subr.bf16.mxu0 %v630
      %796 = vmatpush2.bf16.msra.mxu0 %v629
      %797 = vmatprep.subr.bf16.mxu0 %v624
      %798 = vmatpush2.bf16.msra.mxu0 %v623
      %799 = vmatprep.mubr.bf16.mxu0 %v188
      %800 = vmatmul.mubr.bf16.gmra.mxu0 %v187
      %v801 = vpop.f32.mrf.mxu0
      %v802 = vadd.f32 0.0, %v801
      %v803 = vpop.f32.mrf.mxu0
      %v804 = vadd.f32 0.0, %v803
      %v805 = vpop.f32.mrf.mxu0
      %v806 = vadd.f32 0.0, %v805
      %v807 = vpop.f32.mrf.mxu0
      %v808 = vadd.f32 0.0, %v807
      %809 = vmatprep.mubr.bf16.mxu0 %v190
      %810 = vmatmul.mubr.bf16.gmra.mxu0 %v189
      %v811 = vpop.f32.mrf.mxu0
      %v812 = vadd.f32 0.0, %v811
      %v813 = vpop.f32.mrf.mxu0
      %v814 = vadd.f32 0.0, %v813
      %v815 = vpop.f32.mrf.mxu0
      %v816 = vadd.f32 0.0, %v815
      %v817 = vpop.f32.mrf.mxu0
      %v818 = vadd.f32 0.0, %v817
      %819 = vdwg.mxu0
      %820 = vmatprep.subr.bf16.mxu0 %v620
      %821 = vmatpush1.bf16.msra.mxu0 %v619
      %822 = vmatprep.subr.bf16.mxu0 %v614
      %823 = vmatpush1.bf16.msra.mxu0 %v613
      %824 = vmatprep.subr.bf16.mxu0 %v608
      %825 = vmatpush1.bf16.msra.mxu0 %v607
      %826 = vmatprep.subr.bf16.mxu0 %v602
      %827 = vmatpush1.bf16.msra.mxu0 %v601
      %828 = vmatprep.subr.bf16.mxu0 %v596
      %829 = vmatpush1.bf16.msra.mxu0 %v595
      %830 = vmatprep.subr.bf16.mxu0 %v590
      %831 = vmatpush1.bf16.msra.mxu0 %v589
      %832 = vmatprep.subr.bf16.mxu0 %v584
      %833 = vmatpush1.bf16.msra.mxu0 %v583
      %834 = vmatprep.subr.bf16.mxu0 %v578
      %835 = vmatpush1.bf16.msra.mxu0 %v577
      %836 = vmatprep.subr.bf16.mxu0 %v668
      %837 = vmatpush2.bf16.msra.mxu0 %v667
      %838 = vmatprep.subr.bf16.mxu0 %v662
      %839 = vmatpush2.bf16.msra.mxu0 %v661
      %840 = vmatprep.subr.bf16.mxu0 %v656
      %841 = vmatpush2.bf16.msra.mxu0 %v655
      %842 = vmatprep.subr.bf16.mxu0 %v650
      %843 = vmatpush2.bf16.msra.mxu0 %v649
      %844 = vmatprep.subr.bf16.mxu0 %v644
      %845 = vmatpush2.bf16.msra.mxu0 %v643
      %846 = vmatprep.subr.bf16.mxu0 %v638
      %847 = vmatpush2.bf16.msra.mxu0 %v637
      %848 = vmatprep.subr.bf16.mxu0 %v632
      %849 = vmatpush2.bf16.msra.mxu0 %v631
      %850 = vmatprep.subr.bf16.mxu0 %v626
      %851 = vmatpush2.bf16.msra.mxu0 %v625
      %852 = vmatprep.mubr.bf16.mxu0 %v188
      %853 = vmatmul.mubr.bf16.gmra.mxu0 %v187
      %v854 = vpop.f32.mrf.mxu0
      %v855 = vadd.f32 0.0, %v854
      %v856 = vpop.f32.mrf.mxu0
      %v857 = vadd.f32 0.0, %v856
      %v858 = vpop.f32.mrf.mxu0
      %v859 = vadd.f32 0.0, %v858
      %v860 = vpop.f32.mrf.mxu0
      %v861 = vadd.f32 0.0, %v860
      %862 = vmatprep.mubr.bf16.mxu0 %v190
      %863 = vmatmul.mubr.bf16.gmra.mxu0 %v189
      %v864 = vpop.f32.mrf.mxu0
      %v865 = vadd.f32 0.0, %v864
      %v866 = vpop.f32.mrf.mxu0
      %v867 = vadd.f32 0.0, %v866
      %v868 = vpop.f32.mrf.mxu0
      %v869 = vadd.f32 0.0, %v868
      %v870 = vpop.f32.mrf.mxu0
      %v871 = vadd.f32 0.0, %v870
      %872 = vdwg.mxu0
      %873 = vmatprep.subr.bf16.mxu0 %v622
      %874 = vmatpush1.bf16.msra.mxu0 %v621
      %875 = vmatprep.subr.bf16.mxu0 %v616
      %876 = vmatpush1.bf16.msra.mxu0 %v615
      %877 = vmatprep.subr.bf16.mxu0 %v610
      %878 = vmatpush1.bf16.msra.mxu0 %v609
      %879 = vmatprep.subr.bf16.mxu0 %v604
      %880 = vmatpush1.bf16.msra.mxu0 %v603
      %881 = vmatprep.subr.bf16.mxu0 %v598
      %882 = vmatpush1.bf16.msra.mxu0 %v597
      %883 = vmatprep.subr.bf16.mxu0 %v592
      %884 = vmatpush1.bf16.msra.mxu0 %v591
      %885 = vmatprep.subr.bf16.mxu0 %v586
      %886 = vmatpush1.bf16.msra.mxu0 %v585
      %887 = vmatprep.subr.bf16.mxu0 %v580
      %888 = vmatpush1.bf16.msra.mxu0 %v579
      %889 = vmatprep.subr.bf16.mxu0 %v670
      %890 = vmatpush2.bf16.msra.mxu0 %v669
      %891 = vmatprep.subr.bf16.mxu0 %v664
      %892 = vmatpush2.bf16.msra.mxu0 %v663
      %893 = vmatprep.subr.bf16.mxu0 %v658
      %894 = vmatpush2.bf16.msra.mxu0 %v657
      %895 = vmatprep.subr.bf16.mxu0 %v652
      %896 = vmatpush2.bf16.msra.mxu0 %v651
      %897 = vmatprep.subr.bf16.mxu0 %v646
      %898 = vmatpush2.bf16.msra.mxu0 %v645
      %899 = vmatprep.subr.bf16.mxu0 %v640
      %900 = vmatpush2.bf16.msra.mxu0 %v639
      %901 = vmatprep.subr.bf16.mxu0 %v634
      %902 = vmatpush2.bf16.msra.mxu0 %v633
      %903 = vmatprep.subr.bf16.mxu0 %v628
      %904 = vmatpush2.bf16.msra.mxu0 %v627
      %905 = vmatprep.mubr.bf16.mxu0 %v188
      %906 = vmatmul.mubr.bf16.gmra.mxu0 %v187
      %v907 = vpop.f32.mrf.mxu0
      %v908 = vadd.f32 0.0, %v907
      %v909 = vpop.f32.mrf.mxu0
      %v910 = vadd.f32 0.0, %v909
      %v911 = vpop.f32.mrf.mxu0
      %v912 = vadd.f32 0.0, %v911
      %v913 = vpop.f32.mrf.mxu0
      %v914 = vadd.f32 0.0, %v913
      %915 = vmatprep.mubr.bf16.mxu0 %v190
      %916 = vmatmul.mubr.bf16.gmra.mxu0 %v189
      %v917 = vpop.f32.mrf.mxu0
      %v918 = vadd.f32 0.0, %v917
      %v919 = vpop.f32.mrf.mxu0
      %v920 = vadd.f32 0.0, %v919
      %v921 = vpop.f32.mrf.mxu0
      %v922 = vadd.f32 0.0, %v921
      %v923 = vpop.f32.mrf.mxu0
      %v924 = vadd.f32 0.0, %v923
      %925 = vdwg.mxu0
      %v926 = vlaneseq
      %v927 = vshrl.u32 %v926, 7
      %v928 = vadd.s32 %v927, 8
      %v929 = vadd.s32 %v927, 16
      %v930 = vadd.s32 %v927, 24
      %vm931 = vcmp.lt.s32.totalorder %v927, 0
      %v932 = vsub.s32 0, %v927
      %v933 = vsel %vm931, %v932, %v927
      %v934 = vshrl.u32 %v933, 4
      %v935 = vand.u32 %v933, 15
      %v936 = vsub.s32 0, %v935
      %v937 = vsel %vm931, %v936, %v935
      %vm938 = vcmp.lt.s32.totalorder %v928, 0
      %v939 = vsub.s32 0, %v928
      %v940 = vsel %vm938, %v939, %v928
      %v941 = vshrl.u32 %v940, 4
      %v942 = vand.u32 %v940, 15
      %v943 = vsub.s32 0, %v942
      %v944 = vsel %vm938, %v943, %v942
      %vm945 = vcmp.lt.s32.totalorder %v929, 0
      %v946 = vsub.s32 0, %v929
      %v947 = vsel %vm945, %v946, %v929
      %v948 = vshrl.u32 %v947, 4
      %v949 = vand.u32 %v947, 15
      %v950 = vsub.s32 0, %v949
      %v951 = vsel %vm945, %v950, %v949
      %vm952 = vcmp.lt.s32.totalorder %v930, 0
      %v953 = vsub.s32 0, %v930
      %v954 = vsel %vm952, %v953, %v930
      %v955 = vshrl.u32 %v954, 4
      %v956 = vand.u32 %v954, 15
      %v957 = vsub.s32 0, %v956
      %v958 = vsel %vm952, %v957, %v956
      %vm959 = vcmp.ne.s32.totalorder %v937, 0
      %vm960 = vcmp.ne.s32.totalorder %v944, 0
      %vm961 = vcmp.ne.s32.totalorder %v951, 0
      %vm962 = vcmp.ne.s32.totalorder %v958, 0
      %vm963 = vcmp.lt.s32.totalorder %v937, 0
      %vm964 = vcmp.lt.s32.totalorder %v944, 0
      %vm965 = vcmp.lt.s32.totalorder %v951, 0
      %vm966 = vcmp.lt.s32.totalorder %v958, 0
      %vm967 = vmand %vm963, %vm959
      %vm968 = vmand %vm964, %vm960
      %vm969 = vmand %vm965, %vm961
      %vm970 = vmand %vm966, %vm962
      %v971 = vadd.s32 %v937, 16
      %v972 = vadd.s32 %v944, 16
      %v973 = vadd.s32 %v951, 16
      %v974 = vadd.s32 %v958, 16
      %v975 = vsel %vm967, %v971, %v937
      %v976 = vsel %vm968, %v972, %v944
      %v977 = vsel %vm969, %v973, %v951
      %v978 = vsel %vm970, %v974, %v958
      %v979 = vld [vmem:[%s2] sm:$0x3]
      %v981 = vlaneseq
      %v982 = vshrl.u32 %v981, 7
      %v983 = vsub.s32 0, %v982
      %v984 = vrot.slane %v979, %v983
      %v985 = vlaneseq
      %v986 = vshrl.u32 %v985, 7
      %v987 = vsub.s32 1, %v986
      %v988 = vrot.slane %v979, %v987
      %v991 = vadd.f32 %v855, %v984
      %v992 = vadd.f32 %v857, %v988
      %v993 = vadd.f32 %v859, %v984
      %v994 = vadd.f32 %v861, %v988
      %v995 = vadd.f32 %v865, %v984
      %v996 = vadd.f32 %v867, %v988
      %v997 = vadd.f32 %v869, %v984
      %v998 = vadd.f32 %v871, %v988
      %v999 = vrot.slane %v802, 7
      %v1000 = vrot.slane %v804, 7
      %v1001 = vrot.slane %v806, 7
      %v1002 = vrot.slane %v808, 7
      %v1003 = vrot.slane %v812, 7
      %v1004 = vrot.slane %v814, 7
      %v1005 = vrot.slane %v816, 7
      %v1006 = vrot.slane %v818, 7
      %vm1007 = vcmp.lt.s32.totalorder %v927, 1
      %v1008 = vsel %vm1007, %v1003, %v1005
      %v1009 = vsel %vm1007, %v1004, %v1006
      %v1010 = vsel %vm1007, %v1001, %v1003
      %v1011 = vsel %vm1007, %v1002, %v1004
      %v1012 = vsel %vm1007, %v999, %v1001
      %v1013 = vsel %vm1007, %v1000, %v1002
      %v1014 = vsel %vm1007, %v1005, %v999
      %v1015 = vsel %vm1007, %v1006, %v1000
      %v1016 = vadd.s32 %v975, 4294967295
      %v1017 = vadd.s32 %v976, 4294967295
      %v1018 = vadd.s32 %v977, 4294967295
      %v1019 = vadd.s32 %v978, 4294967295
      %vm1020 = vcmp.ge.s32.totalorder %v1016, 0
      %vm1021 = vcmp.ge.s32.totalorder %v1017, 0
      %vm1022 = vcmp.ge.s32.totalorder %v1018, 0
      %vm1023 = vcmp.ge.s32.totalorder %v1019, 0
      %vm1024 = vcmp.lt.s32.totalorder %v1016, 16
      %vm1025 = vcmp.lt.s32.totalorder %v1017, 16
      %vm1026 = vcmp.lt.s32.totalorder %v1018, 16
      %vm1027 = vcmp.lt.s32.totalorder %v1019, 16
      %vm1028 = vmand %vm1020, %vm1024
      %vm1029 = vmand %vm1021, %vm1025
      %vm1030 = vmand %vm1022, %vm1026
      %vm1031 = vmand %vm1023, %vm1027
      %v1032 = vsel %vm1028, %v1014, 0.0
      %v1033 = vsel %vm1028, %v1015, 0.0
      %v1034 = vsel %vm1029, %v1012, 0.0
      %v1035 = vsel %vm1029, %v1013, 0.0
      %v1036 = vsel %vm1030, %v1010, 0.0
      %v1037 = vsel %vm1030, %v1011, 0.0
      %v1038 = vsel %vm1031, %v1008, 0.0
      %v1039 = vsel %vm1031, %v1009, 0.0
      %v1040 = vadd.f32 %v991, %v1032
      %v1041 = vadd.f32 %v992, %v1033
      %v1042 = vadd.f32 %v993, %v1034
      %v1043 = vadd.f32 %v994, %v1035
      %v1044 = vadd.f32 %v995, %v1036
      %v1045 = vadd.f32 %v996, %v1037
      %v1046 = vadd.f32 %v997, %v1038
      %v1047 = vadd.f32 %v998, %v1039
      %v1048 = vrot.slane %v908, 1
      %v1049 = vrot.slane %v910, 1
      %v1050 = vrot.slane %v912, 1
      %v1051 = vrot.slane %v914, 1
      %v1052 = vrot.slane %v918, 1
      %v1053 = vrot.slane %v920, 1
      %v1054 = vrot.slane %v922, 1
      %v1055 = vrot.slane %v924, 1
      %vm1056 = vcmp.lt.s32.totalorder %v927, 7
      %v1057 = vsel %vm1056, %v1052, %v1054
      %v1058 = vsel %vm1056, %v1053, %v1055
      %v1059 = vsel %vm1056, %v1050, %v1052
      %v1060 = vsel %vm1056, %v1051, %v1053
      %v1061 = vsel %vm1056, %v1048, %v1050
      %v1062 = vsel %vm1056, %v1049, %v1051
      %v1063 = vsel %vm1056, %v1054, %v1048
      %v1064 = vsel %vm1056, %v1055, %v1049
      %v1065 = vadd.s32 %v975, 1
      %v1066 = vadd.s32 %v976, 1
      %v1067 = vadd.s32 %v977, 1
      %v1068 = vadd.s32 %v978, 1
      %vm1069 = vcmp.ge.s32.totalorder %v1065, 0
      %vm1070 = vcmp.ge.s32.totalorder %v1066, 0
      %vm1071 = vcmp.ge.s32.totalorder %v1067, 0
      %vm1072 = vcmp.ge.s32.totalorder %v1068, 0
      %vm1073 = vcmp.lt.s32.totalorder %v1065, 16
      %vm1074 = vcmp.lt.s32.totalorder %v1066, 16
      %vm1075 = vcmp.lt.s32.totalorder %v1067, 16
      %vm1076 = vcmp.lt.s32.totalorder %v1068, 16
      %vm1077 = vmand %vm1069, %vm1073
      %vm1078 = vmand %vm1070, %vm1074
      %vm1079 = vmand %vm1071, %vm1075
      %vm1080 = vmand %vm1072, %vm1076
      %v1081 = vsel %vm1077, %v1061, 0.0
      %v1082 = vsel %vm1077, %v1062, 0.0
      %v1083 = vsel %vm1078, %v1059, 0.0
      %v1084 = vsel %vm1078, %v1060, 0.0
      %v1085 = vsel %vm1079, %v1057, 0.0
      %v1086 = vsel %vm1079, %v1058, 0.0
      %v1087 = vsel %vm1080, %v1063, 0.0
      %v1088 = vsel %vm1080, %v1064, 0.0
      %v1089 = vadd.f32 %v1040, %v1081
      %v1090 = vadd.f32 %v1041, %v1082
      %v1091 = vadd.f32 %v1042, %v1083
      %v1092 = vadd.f32 %v1043, %v1084
      %v1093 = vadd.f32 %v1044, %v1085
      %v1094 = vadd.f32 %v1045, %v1086
      %v1095 = vadd.f32 %v1046, %v1087
      %v1096 = vadd.f32 %v1047, %v1088
      %v1097 = vxor.u32 %v1089, 2147483648
      %v1098 = vxor.u32 %v1090, 2147483648
      %v1099 = vxor.u32 %v1091, 2147483648
      %v1100 = vxor.u32 %v1092, 2147483648
      %v1101 = vxor.u32 %v1093, 2147483648
      %v1102 = vxor.u32 %v1094, 2147483648
      %v1103 = vxor.u32 %v1095, 2147483648
      %v1104 = vxor.u32 %v1096, 2147483648
      %v1105 = vmul.f32 %v1097, 1.442695
      %v1106 = vpow.pop %v1105
      %v1107 = vmul.f32 %v1098, 1.442695
      %v1108 = vpow.pop %v1107
      %v1109 = vmul.f32 %v1099, 1.442695
      %v1110 = vpow.pop %v1109
      %v1111 = vmul.f32 %v1100, 1.442695
      %v1112 = vpow.pop %v1111
      %v1113 = vmul.f32 %v1101, 1.442695
      %v1114 = vpow.pop %v1113
      %v1115 = vmul.f32 %v1102, 1.442695
      %v1116 = vpow.pop %v1115
      %v1117 = vmul.f32 %v1103, 1.442695
      %v1118 = vpow.pop %v1117
      %v1119 = vmul.f32 %v1104, 1.442695
      %v1120 = vpow.pop %v1119
      %v1121 = vadd.f32 %v1106, 1.0
      %v1122 = vadd.f32 %v1108, 1.0
      %v1123 = vadd.f32 %v1110, 1.0
      %v1124 = vadd.f32 %v1112, 1.0
      %v1125 = vadd.f32 %v1114, 1.0
      %v1126 = vadd.f32 %v1116, 1.0
      %v1127 = vadd.f32 %v1118, 1.0
      %v1128 = vadd.f32 %v1120, 1.0
      %v1129 = vrcp.pop %v1121
      %v1130 = vmul.f32 1.0, %v1129
      %v1131 = vrcp.pop %v1122
      %v1132 = vmul.f32 1.0, %v1131
      %v1133 = vrcp.pop %v1123
      %v1134 = vmul.f32 1.0, %v1133
      %v1135 = vrcp.pop %v1124
      %v1136 = vmul.f32 1.0, %v1135
      %v1137 = vrcp.pop %v1125
      %v1138 = vmul.f32 1.0, %v1137
      %v1139 = vrcp.pop %v1126
      %v1140 = vmul.f32 1.0, %v1139
      %v1141 = vrcp.pop %v1127
      %v1142 = vmul.f32 1.0, %v1141
      %v1143 = vrcp.pop %v1128
      %v1144 = vmul.f32 1.0, %v1143
      %v1145 = vmul.f32 %v179, %v1130
      %v1146 = vmul.f32 %v180, %v1132
      %v1147 = vmul.f32 %v181, %v1134
      %v1148 = vmul.f32 %v182, %v1136
      %v1149 = vmul.f32 %v183, %v1138
      %v1150 = vmul.f32 %v184, %v1140
      %v1151 = vmul.f32 %v185, %v1142
      %v1152 = vmul.f32 %v186, %v1144
      %1153 = vst [vmem:[%s177] sm:$0xff] %v1145
      %1154 = vst [vmem:[%s177 + $0x8] sm:$0xff] %v1146
      %1155 = vst [vmem:[%s177 + $0x10] sm:$0xff] %v1147
      %1156 = vst [vmem:[%s177 + $0x18] sm:$0xff] %v1148
      %1157 = vst [vmem:[%s177 + $0x20] sm:$0xff] %v1149
      %1158 = vst [vmem:[%s177 + $0x28] sm:$0xff] %v1150
      %1159 = vst [vmem:[%s177 + $0x30] sm:$0xff] %v1151
      %1160 = vst [vmem:[%s177 + $0x38] sm:$0xff] %v1152
      %s1161 = smul.u32 4, %s14
      %p1162 = scmp.lt.s32.totalorder %s1161, 7
      %s1163 = scalar_select %p1162, %s1161, 7
      %s1164 = smul.addr %s1163, 2
      %s1165 = smul.addr %s1164, 8
      %s1166 = scalar_lea.vmem %s3, %s1165
      // Predicated region
      $region33: #{ea_forward.1} parent=31 // pred_check
        %p1167 = pneg %p100
      $region34: #{ea_forward.1} parent=31 // pred_check_branch
        %1169 = sbr.rel (%p1167) target = $region36
      $region35: #{ea_forward.1} parent=31 // pred_region
        %s1170 = smul.u32 4, %s14
      $region36: #{ea_forward.1} parent=31 // pred_fallthru
        _
    $region32: #{ea_forward.1} parent=5 // pred_fallthru
      _
    %p1171 = scmp.le.s32.totalorder 2, %s9
    // Predicated region
    $region37: #{ea_forward.1} parent=5 // pred_check
      %p1172 = pneg %p1171
    $region38: #{ea_forward.1} parent=5 // pred_check_branch
      %1174 = sbr.rel (%p1172) target = $region40
    $region39: #{ea_forward.1} parent=5 // pred_region
      %s1175 = ssub.s32 %s9, 2
      // Predicated region
      $region41: #{ea_forward.1} parent=39 // pred_check
        %p1176 = pneg %p106
      $region42: #{ea_forward.1} parent=39 // pred_check_branch
        %1178 = sbr.rel (%p1176) target = $region44
      $region43: #{ea_forward.1} parent=39 // pred_region
        %s1179 = smul.u32 4, %s15
        %p1180 = scmp.lt.s32.totalorder %s1179, 7
        %s1181 = scalar_select %p1180, %s1179, 7
        %s1182 = smul.addr %s1181, 2
        %s1183 = smul.addr %s1182, 8
        %s1184 = scalar_lea.vmem %s3, %s1183
      $region44: #{ea_forward.1} parent=39 // pred_fallthru
        _
    $region40: #{ea_forward.1} parent=5 // pred_fallthru
      _
  $region6: #{ea_forward.1} parent=0 // loop_footer
    %s13 = sadd.s32 1, %s9
  $region7: #{ea_forward.1} parent=0 // loop_footer_branch
    %8 = sbr.rel target = $region3
  $region8: #{ea_forward.1} parent=0 // loop_exit
    _

</llo_original>
